<compile_context>
chip_gen: v7x
topology: tpu7x:2x2x1
jax: 0.10.0
libtpu: 0.0.40
codegen_flags: <defaults>
</compile_context>

<pallas_src>
import jax
import jax.numpy as jnp
from jax.experimental import pallas as pl
from jax.experimental.pallas import tpu as pltpu

_LANE = 128
_TARGET_STEP_BYTES = 2 << 20   # ~2 MiB of x+out per grid step (HBM-roofline sweet spot)
_MXU_MIN_CIN = 32              # contraction-dim crossover: below this, VPU FMA chain


def _outconv_kernel(x_ref, w_ref, b_ref, o_ref):
    # x_ref: (TB, Cin, TL)  w_ref: (Cout, Cin)  b_ref: (Cout, 1)  o_ref: (TB, Cout, TL)
    cout, cin = w_ref.shape
    tb = x_ref.shape[0]
    tl = x_ref.shape[-1]

    w = w_ref[...]                              # native dtype (bf16 stays bf16 for MXU)
    b = b_ref[...].astype(jnp.float32)          # (Cout, 1) f32 accumulator bias
    use_mxu = cin >= _MXU_MIN_CIN
    if not use_mxu:
        # VPU path computes in f32 (v5e VPU has no bf16); cost hidden under DMA.
        wf = w.astype(jnp.float32)

    for bi in range(tb):                        # static, usually 1
        if use_mxu:
            # Large contraction dim: worth the MXU. Native-dtype operands,
            # f32 accumulation on the systolic array.
            acc = jnp.dot(w, x_ref[bi], preferred_element_type=jnp.float32) + b
        else:
            # Tiny contraction dim (e.g. Cin=4): short unrolled broadcast-FMA
            # chain on the VPU, (Cout, TL) lane-dense.
            xb = x_ref[bi].astype(jnp.float32)  # (Cin, TL)
            acc = jnp.broadcast_to(b, (cout, tl))
            for ci in range(cin):
                acc = acc + wf[:, ci:ci + 1] * xb[ci:ci + 1, :]
        o_ref[bi] = acc.astype(o_ref.dtype)


def _choose_tiles(N, Cin, Cout, L, itemsize):
    """Pick (TB, TL, Lp): batch sub-block, lane tile, padded length."""
    if L < _LANE:
        # Tiny sequences: launch-bound; one L tile, grid over batch.
        return 1, L, L

    per_lane_bytes = (Cin + Cout) * itemsize
    # Lane tile sized so each step moves ~_TARGET_STEP_BYTES; multiple of 128.
    tl = (_TARGET_STEP_BYTES // per_lane_bytes) // _LANE * _LANE
    tl = max(_LANE, min(((L + _LANE - 1) // _LANE) * _LANE, tl))

    # v7x has 2 TensorCores: keep >= 2 parallel grid steps when N == 1 and
    # there is enough L to split.
    if N == 1:
        while tl > _LANE and (L + tl - 1) // tl < 2:
            tl = max(_LANE, (tl // 2) // _LANE * _LANE)

    lp = ((L + tl - 1) // tl) * tl   # pad L up to a multiple of the tile

    # If the whole L fits in one tile and N > 1, fold batch rows into the
    # block to amortize per-step overhead (bigger DMAs), keeping >= 2 steps.
    tb = 1
    if lp == tl and N > 1:
        step_bytes = (Cin + Cout) * tl * itemsize
        tb = max(1, min(N // 2, _TARGET_STEP_BYTES // max(step_bytes, 1)))
        while N % tb:
            tb -= 1
    return tb, tl, lp


def out_conv(x, weight, bias):
    """Equivalent of nn.Conv1d(in_channels, out_channels, kernel_size=1)(x).

    x:      (N, Cin, L)
    weight: (Cout, Cin, 1)   (PyTorch Conv1d weight layout)
    bias:   (Cout,)
    returns (N, Cout, L)
    """
    N, Cin, L = x.shape
    Cout = weight.shape[0]
    itemsize = jnp.dtype(x.dtype).itemsize

    w2d = weight[:, :, 0].astype(x.dtype)   # (Cout, Cin) — tiny, resident in VMEM
    b2d = bias.reshape(Cout, 1)             # (Cout, 1)

    TB, TL, Lp = _choose_tiles(N, Cin, Cout, L, itemsize)
    x_in = x if Lp == L else jnp.pad(x, ((0, 0), (0, 0), (0, Lp - L)))
    grid = (N // TB, Lp // TL)

    # VMEM budget: double-buffered in+out blocks plus resident weight/bias,
    # with headroom; capped at 64 MiB so the same code is safe on v7x.
    block_bytes = TB * (Cin + Cout) * TL * itemsize
    vmem_limit = int(min(64 << 20, max(32 << 20, 6 * block_bytes)))

    # Correct mem-bound picture for XLA's scheduler (free overlap win).
    cost = pl.CostEstimate(
        flops=2 * N * Cout * Cin * L,
        transcendentals=0,
        bytes_accessed=itemsize * N * (Cin + Cout) * L + 4 * Cout * (Cin + 1),
    )

    out = pl.pallas_call(
        _outconv_kernel,
        out_shape=jax.ShapeDtypeStruct((N, Cout, Lp), x.dtype),
        grid_spec=pltpu.PrefetchScalarGridSpec(
            num_scalar_prefetch=0,
            grid=grid,
            in_specs=[
                pl.BlockSpec((TB, Cin, TL), lambda n, l: (n, 0, l)),  # activations
                pl.BlockSpec((Cout, Cin), lambda n, l: (0, 0)),       # weight (resident)
                pl.BlockSpec((Cout, 1), lambda n, l: (0, 0)),         # bias   (resident)
            ],
            out_specs=pl.BlockSpec((TB, Cout, TL), lambda n, l: (n, 0, l)),
        ),
        compiler_params=pltpu.CompilerParams(
            dimension_semantics=("parallel", "parallel"),
            vmem_limit_bytes=vmem_limit,
        ),
        cost_estimate=cost,
    )(x_in, w2d, b2d)

    return out if Lp == L else out[:, :, :L]


def _ref(x, weight, bias):
    return jnp.einsum("ncl,oc->nol", x, weight[:, :, 0]) + bias[None, :, None]


if __name__ == "__main__":
    # Shapes consistent with the module: batch=2, in_channels=4,
    # out_channels=8, sequence length=16.
    N, Cin, Cout, L = 2, 4, 8, 16

    key = jax.random.PRNGKey(0)
    kx, kw, kb = jax.random.split(key, 3)

    x = jax.random.normal(kx, (N, Cin, L), dtype=jnp.float32)
    bound = 1.0 / (Cin ** 0.5)
    weight = jax.random.uniform(kw, (Cout, Cin, 1), minval=-bound, maxval=bound,
                                dtype=jnp.float32)
    bias = jax.random.uniform(kb, (Cout,), minval=-bound, maxval=bound,
                              dtype=jnp.float32)

    y = out_conv(x, weight, bias)
    jax.block_until_ready(y)
    assert y.shape == (N, Cout, L)
    assert jnp.allclose(y, _ref(x, weight, bias), atol=1e-5, rtol=1e-5)

    # Extra check: L >= 128, not 128-divisible (exercises padding + L-split).
    x2 = jax.random.normal(kx, (1, Cin, 300), dtype=jnp.float32)
    y2 = out_conv(x2, weight, bias)
    jax.block_until_ready(y2)
    assert y2.shape == (1, Cout, 300)
    assert jnp.allclose(y2, _ref(x2, weight, bias), atol=1e-5, rtol=1e-5)

    # Extra check: large contraction dim (exercises the MXU path; MXU default
    # precision uses bf16 passes, hence the looser tolerance).
    Cin3 = 32
    x3 = jax.random.normal(kw, (2, Cin3, 256), dtype=jnp.float32)
    w3 = jax.random.uniform(kb, (Cout, Cin3, 1), minval=-0.2, maxval=0.2,
                            dtype=jnp.float32)
    y3 = out_conv(x3, w3, bias)
    jax.block_until_ready(y3)
    assert jnp.allclose(y3, _ref(x3, w3, bias), atol=2e-2, rtol=2e-2)

    print("KERNEL_OK")
</pallas_src>

<mosaic_0001>
module attributes {stable_mosaic.version = 11 : i64} {
  func.func @_outconv_kernel(%arg0: i32, %arg1: i32, %arg2: memref<1x4x16xf32, #tpu.memory_space<vmem>>, %arg3: memref<8x4xf32, #tpu.memory_space<vmem>>, %arg4: memref<8x1xf32, #tpu.memory_space<vmem>>, %arg5: memref<1x8x16xf32, #tpu.memory_space<vmem>>) attributes {dimension_semantics = [#tpu.dimension_semantics<parallel>, #tpu.dimension_semantics<parallel>], iteration_bounds = array<i64: 2, 1>, scalar_prefetch = 0 : i64, scratch_operands = 0 : i64, tpu.core_type = #tpu.core_type<tc>, window_params = [{transform_indices = @transform_0, window_bounds = array<i64: 1, 4, 16>}, {pipeline_mode = #tpu.pipeline_mode<synchronous>, transform_indices = @transform_1, window_bounds = array<i64: 8, 4>}, {pipeline_mode = #tpu.pipeline_mode<synchronous>, transform_indices = @transform_2, window_bounds = array<i64: 8, 1>}, {transform_indices = @transform_3, window_bounds = array<i64: 1, 8, 16>}]} {
    %c0 = arith.constant 0 : index
    %c0_0 = arith.constant 0 : index
    %0 = vector.load %arg3[%c0, %c0_0] : memref<8x4xf32, #tpu.memory_space<vmem>>, vector<8x4xf32>
    %c0_1 = arith.constant 0 : index
    %c0_2 = arith.constant 0 : index
    %1 = vector.load %arg4[%c0_1, %c0_2] : memref<8x1xf32, #tpu.memory_space<vmem>>, vector<8x1xf32>
    %c0_3 = arith.constant 0 : index
    %c0_4 = arith.constant 0 : index
    %c0_5 = arith.constant 0 : index
    %2 = vector.load %arg2[%c0_3, %c0_4, %c0_5] : memref<1x4x16xf32, #tpu.memory_space<vmem>>, vector<1x4x16xf32>
    %3 = vector.shape_cast %2 : vector<1x4x16xf32> to vector<4x16xf32>
    %4 = vector.shape_cast %1 : vector<8x1xf32> to vector<8x1xf32>
    %5 = vector.broadcast %4 : vector<8x1xf32> to vector<8x16xf32>
    %6 = vector.extract_strided_slice %0 {offsets = [0, 0], sizes = [8, 1], strides = [1, 1]} : vector<8x4xf32> to vector<8x1xf32>
    %7 = vector.extract_strided_slice %3 {offsets = [0, 0], sizes = [1, 16], strides = [1, 1]} : vector<4x16xf32> to vector<1x16xf32>
    %8 = vector.broadcast %6 : vector<8x1xf32> to vector<8x16xf32>
    %9 = vector.broadcast %7 : vector<1x16xf32> to vector<8x16xf32>
    %10 = arith.mulf %8, %9 : vector<8x16xf32>
    %11 = arith.addf %5, %10 : vector<8x16xf32>
    %12 = vector.extract_strided_slice %0 {offsets = [0, 1], sizes = [8, 1], strides = [1, 1]} : vector<8x4xf32> to vector<8x1xf32>
    %13 = vector.extract_strided_slice %3 {offsets = [1, 0], sizes = [1, 16], strides = [1, 1]} : vector<4x16xf32> to vector<1x16xf32>
    %14 = vector.broadcast %12 : vector<8x1xf32> to vector<8x16xf32>
    %15 = vector.broadcast %13 : vector<1x16xf32> to vector<8x16xf32>
    %16 = arith.mulf %14, %15 : vector<8x16xf32>
    %17 = arith.addf %11, %16 : vector<8x16xf32>
    %18 = vector.extract_strided_slice %0 {offsets = [0, 2], sizes = [8, 1], strides = [1, 1]} : vector<8x4xf32> to vector<8x1xf32>
    %19 = vector.extract_strided_slice %3 {offsets = [2, 0], sizes = [1, 16], strides = [1, 1]} : vector<4x16xf32> to vector<1x16xf32>
    %20 = vector.broadcast %18 : vector<8x1xf32> to vector<8x16xf32>
    %21 = vector.broadcast %19 : vector<1x16xf32> to vector<8x16xf32>
    %22 = arith.mulf %20, %21 : vector<8x16xf32>
    %23 = arith.addf %17, %22 : vector<8x16xf32>
    %24 = vector.extract_strided_slice %0 {offsets = [0, 3], sizes = [8, 1], strides = [1, 1]} : vector<8x4xf32> to vector<8x1xf32>
    %25 = vector.extract_strided_slice %3 {offsets = [3, 0], sizes = [1, 16], strides = [1, 1]} : vector<4x16xf32> to vector<1x16xf32>
    %26 = vector.broadcast %24 : vector<8x1xf32> to vector<8x16xf32>
    %27 = vector.broadcast %25 : vector<1x16xf32> to vector<8x16xf32>
    %28 = arith.mulf %26, %27 : vector<8x16xf32>
    %29 = arith.addf %23, %28 : vector<8x16xf32>
    %c0_6 = arith.constant 0 : index
    %c0_7 = arith.constant 0 : index
    %c0_8 = arith.constant 0 : index
    %30 = vector.load %arg5[%c0_6, %c0_7, %c0_8] : memref<1x8x16xf32, #tpu.memory_space<vmem>>, vector<1x8x16xf32>
    %31 = vector.shape_cast %30 : vector<1x8x16xf32> to vector<8x16xf32>
    %32 = vector.shape_cast %29 : vector<8x16xf32> to vector<1x8x16xf32>
    tpu.vector_store %arg5[%c0_6, %c0_7, %c0_8], %32 {strides = array<i32>} : memref<1x8x16xf32, #tpu.memory_space<vmem>>, vector<1x8x16xf32>,
    return
  }
  func.func @transform_0(%arg0: i32, %arg1: i32) -> (i32, i32, i32) {
    %c0_i32 = arith.constant 0 : i32
    %c0_i32_0 = arith.constant 0 : i32
    return %arg0, %c0_i32, %arg1 : i32, i32, i32
  }
  func.func @transform_1(%arg0: i32, %arg1: i32) -> (i32, i32) {
    %c0_i32 = arith.constant 0 : i32
    %c0_i32_0 = arith.constant 0 : i32
    %c0_i32_1 = arith.constant 0 : i32
    return %c0_i32, %c0_i32_0 : i32, i32
  }
  func.func @transform_2(%arg0: i32, %arg1: i32) -> (i32, i32) {
    %c0_i32 = arith.constant 0 : i32
    %c0_i32_0 = arith.constant 0 : i32
    %c0_i32_1 = arith.constant 0 : i32
    return %c0_i32, %c0_i32_0 : i32, i32
  }
  func.func @transform_3(%arg0: i32, %arg1: i32) -> (i32, i32, i32) {
    %c0_i32 = arith.constant 0 : i32
    %c0_i32_0 = arith.constant 0 : i32
    return %arg0, %c0_i32, %arg1 : i32, i32, i32
  }
}

</mosaic_0001>

<llo_original>
// kernel: tpu_custom_call.1
$region0: #{tpu_custom_call.1}
  #allocation0 [shape = 'u32[]', space=smem, size = 0x4, offset = 0x4, fixed_abs, tag = 'smem constant byte address 0x4 - core index']
  #allocation1 [shape = 'u32[144,128]{1,0:T(1,128)}', space=vmem, size = 0x12000, scoped, tag = 'internal scratch']
  %s0 = inlined_call_operand.vmem [shape: f32[2,4,16], index: 0, kind: input, shape index: {}]
  %s1 = inlined_call_operand.vmem [shape: f32[8,4], index: 1, kind: input, shape index: {}]
  %s2 = inlined_call_operand.vmem [shape: f32[8,1], index: 2, kind: input, shape index: {}]
  %s3 = inlined_call_operand.hbm [shape: f32[2,8,16], index: 3, kind: output, shape index: {}]
  %s4 = sld [smem:[#allocation0]]
  $region45: #{tpu_custom_call.1} parent=0
    _
  %s6 = ssub.s32 1, %s4
  %s7 = scalar_select 0, %s6, %s4
  $region1: #{tpu_custom_call.1} parent=0
    #allocation2 [shape = 'u8[8192]{0}', space=vmem, size = 0x2000, scoped, tag = 'output window, operand 0']
    #allocation3 [shape = 's32[2]{0}', space=sflag, size = 0x8, scoped, tag = 'scoped memory for tpu_custom_call.1']
    %8 = vsyncpa [#allocation3], 0
    %s9 = scalar_lea.sflag [#allocation3], 1
    %10 = vsyncpa %s9, 0
    loop: start=0, step=1, limit=4
    $region2: #{tpu_custom_call.1} parent=1 // loop_pre_header
      _
    $region3: #{tpu_custom_call.1} parent=1 // loop_header
      %s12 = sphi 0, %s16
      %p13 = scmp.ge.s32.totalorder %s12, 4
      %s19 = sphi 0, %s31
      %s20 = sphi 0, %s27
      %s21 = sphi 0, %s19
      %s22 = sphi 0, %s20
      %s23 = sphi 0, %s21
      %s24 = sphi 0, %s22
      %s36 = sphi 0, %s38
      %s39 = sphi 0, %s36
      %s40 = sphi 0, %s39
      %s56 = sphi 0, %s40
      %s60 = sphi 0, %s60
      %s62 = sphi 0, %s60
      %s63 = sphi 0, %s62
      %s77 = sphi 0, %s63
      %s81 = sphi 0, %s81
      %s83 = sphi 0, %s81
      %s84 = sphi 0, %s83
      %s98 = sphi 0, %s84
      %s106 = sphi 0, %s108
      %s109 = sphi 0, %s106
      %s110 = sphi 0, %s109
      %s126 = sphi 0, %s110
    $region4: #{tpu_custom_call.1} parent=1 // loop_header_branch
      %15 = sbr.rel (%p13) target = $region8
    $region5: #{tpu_custom_call.1} parent=1 // loop_body
      %s17 = ssub.s32 %s12, 1
      %s18 = ssub.s32 %s12, 2
      %s25 = sadd.s32 1, %s20
      %p26 = scmp.ge.s32.totalorder %s25, 1
      %s27 = scalar_select %p26, 0, %s25
      %s28 = sadd.s32 1, %s19
      %s29 = scalar_select %p26, %s28, %s19
      %p30 = scmp.ge.s32.totalorder %s29, 2
      %s31 = scalar_select %p30, 0, %s29
      %s32 = ssub.s32 %s19, %s31
      %s33 = ssub.s32 %s20, %s27
      %s34 = sor.u32 %s32, %s33
      %p35 = scmp.eq.s32.totalorder %s34, 0
      %s37 = sadd.s32 %s36, 1
      %s38 = scalar_select %p35, %s36, %s37
      %p41 = pneg %p35
      %p42 = scmp.eq.s32.totalorder %s12, 1
      %p43 = por %p41, %p42
      %p44 = scmp.ne.s32.totalorder %s36, %s39
      %p45 = scmp.eq.s32.totalorder %s12, 0
      %p46 = por %p44, %p45
      %p47 = scmp.ne.s32.totalorder %s36, %s39
      %p48 = scmp.eq.s32.totalorder %s17, 1
      %p49 = por %p47, %p48
      %p50 = scmp.ne.s32.totalorder %s39, %s40
      %p51 = scmp.eq.s32.totalorder %s17, 0
      %p52 = por %p50, %p51
      %p53 = scmp.ne.s32.totalorder %s39, %s40
      %p54 = scmp.eq.s32.totalorder %s18, 1
      %p55 = por %p53, %p54
      %p57 = scmp.ne.s32.totalorder %s40, %s56
      %p58 = scmp.eq.s32.totalorder %s18, 0
      %p59 = por %p57, %p58
      %s61 = sadd.s32 %s60, 1
      %p64 = scmp.eq.s32.totalorder %s12, 1
      %p65 = scmp.ne.s32.totalorder %s60, %s62
      %p66 = scmp.eq.s32.totalorder %s12, 0
      %p67 = por %p65, %p66
      %p68 = scmp.ne.s32.totalorder %s60, %s62
      %p69 = scmp.eq.s32.totalorder %s17, 1
      %p70 = por %p68, %p69
      %p71 = scmp.ne.s32.totalorder %s62, %s63
      %p72 = scmp.eq.s32.totalorder %s17, 0
      %p73 = por %p71, %p72
      %p74 = scmp.ne.s32.totalorder %s62, %s63
      %p75 = scmp.eq.s32.totalorder %s18, 1
      %p76 = por %p74, %p75
      %p78 = scmp.ne.s32.totalorder %s63, %s77
      %p79 = scmp.eq.s32.totalorder %s18, 0
      %p80 = por %p78, %p79
      %s82 = sadd.s32 %s81, 1
      %p85 = scmp.eq.s32.totalorder %s12, 1
      %p86 = scmp.ne.s32.totalorder %s81, %s83
      %p87 = scmp.eq.s32.totalorder %s12, 0
      %p88 = por %p86, %p87
      %p89 = scmp.ne.s32.totalorder %s81, %s83
      %p90 = scmp.eq.s32.totalorder %s17, 1
      %p91 = por %p89, %p90
      %p92 = scmp.ne.s32.totalorder %s83, %s84
      %p93 = scmp.eq.s32.totalorder %s17, 0
      %p94 = por %p92, %p93
      %p95 = scmp.ne.s32.totalorder %s83, %s84
      %p96 = scmp.eq.s32.totalorder %s18, 1
      %p97 = por %p95, %p96
      %p99 = scmp.ne.s32.totalorder %s84, %s98
      %p100 = scmp.eq.s32.totalorder %s18, 0
      %p101 = por %p99, %p100
      %s102 = ssub.s32 %s19, %s31
      %s103 = ssub.s32 %s20, %s27
      %s104 = sor.u32 %s102, %s103
      %p105 = scmp.eq.s32.totalorder %s104, 0
      %s107 = sadd.s32 %s106, 1
      %s108 = scalar_select %p105, %s106, %s107
      %p111 = pneg %p105
      %p112 = scmp.eq.s32.totalorder %s12, 1
      %p113 = por %p111, %p112
      %p114 = scmp.ne.s32.totalorder %s106, %s109
      %p115 = scmp.eq.s32.totalorder %s12, 0
      %p116 = por %p114, %p115
      %p117 = scmp.ne.s32.totalorder %s106, %s109
      %p118 = scmp.eq.s32.totalorder %s17, 1
      %p119 = por %p117, %p118
      %p120 = scmp.ne.s32.totalorder %s109, %s110
      %p121 = scmp.eq.s32.totalorder %s17, 0
      %p122 = por %p120, %p121
      %p123 = scmp.ne.s32.totalorder %s109, %s110
      %p124 = scmp.eq.s32.totalorder %s18, 1
      %p125 = por %p123, %p124
      %p127 = scmp.ne.s32.totalorder %s110, %s126
      %p128 = scmp.eq.s32.totalorder %s18, 0
      %p129 = por %p127, %p128
      %p130 = scmp.le.s32.totalorder 1, %s12
      %p131 = scmp.lt.s32.totalorder %s12, 3
      %p132 = pnand %p130, %p131
      %p133 = pneg %p132
      // Predicated region
      $region9: #{tpu_custom_call.1} parent=5 // pred_check
        _
      $region10: #{tpu_custom_call.1} parent=5 // pred_check_branch
        %135 = sbr.rel (%p132) target = $region12
      $region11: #{tpu_custom_call.1} parent=5 // pred_region
        %s136 = ssub.s32 %s12, 1
        // Predicated region
        $region13: #{tpu_custom_call.1} parent=11 // pred_check
          %p137 = pneg %p73
        $region14: #{tpu_custom_call.1} parent=11 // pred_check_branch
          %139 = sbr.rel (%p137) target = $region16
        $region15: #{tpu_custom_call.1} parent=11 // pred_region
          _
        $region16: #{tpu_custom_call.1} parent=11 // pred_fallthru
          _
        // Predicated region
        $region17: #{tpu_custom_call.1} parent=11 // pred_check
          %p140 = pneg %p94
        $region18: #{tpu_custom_call.1} parent=11 // pred_check_branch
          %142 = sbr.rel (%p140) target = $region20
        $region19: #{tpu_custom_call.1} parent=11 // pred_region
          _
        $region20: #{tpu_custom_call.1} parent=11 // pred_fallthru
          _
      $region12: #{tpu_custom_call.1} parent=5 // pred_fallthru
        _
      %p143 = scmp.lt.s32.totalorder %s12, 2
      // Predicated region
      $region21: #{tpu_custom_call.1} parent=5 // pred_check
        %p144 = pneg %p143
      $region22: #{tpu_custom_call.1} parent=5 // pred_check_branch
        %146 = sbr.rel (%p144) target = $region24
      $region23: #{tpu_custom_call.1} parent=5 // pred_region
        // Predicated region
        $region25: #{tpu_custom_call.1} parent=23 // pred_check
          %p147 = pneg %p46
        $region26: #{tpu_custom_call.1} parent=23 // pred_check_branch
          %149 = sbr.rel (%p147) target = $region28
        $region27: #{tpu_custom_call.1} parent=23 // pred_region
          %p150 = scmp.lt.s32.totalorder %s19, 1
          %s151 = scalar_select %p150, %s19, 1
          %p152 = scmp.lt.s32.totalorder %s20, 0
          %s153 = scalar_select %p152, %s20, 0
          %s154 = sadd.s32 %s153, %s151
          %s155 = smul.addr %s154, 4
          %s156 = scalar_lea.vmem %s0, %s155
        $region28: #{tpu_custom_call.1} parent=23 // pred_fallthru
          _
      $region24: #{tpu_custom_call.1} parent=5 // pred_fallthru
        _
      %p157 = scmp.le.s32.totalorder 1, %s12
      %p158 = scmp.lt.s32.totalorder %s12, 3
      %p159 = pnand %p157, %p158
      %p160 = pneg %p159
      // Predicated region
      $region29: #{tpu_custom_call.1} parent=5 // pred_check
        _
      $region30: #{tpu_custom_call.1} parent=5 // pred_check_branch
        %162 = sbr.rel (%p159) target = $region32
      $region31: #{tpu_custom_call.1} parent=5 // pred_region
        %s163 = ssub.s32 %s12, 1
        %p164 = scmp.lt.s32.totalorder %s21, 1
        %s165 = scalar_select %p164, %s21, 1
        %p166 = scmp.lt.s32.totalorder %s22, 0
        %s167 = scalar_select %p166, %s22, 0
        %s168 = sadd.s32 %s167, %s165
        %s169 = smul.addr %s168, 4
        %s170 = scalar_lea.vmem %s0, %s169
        %p171 = pneg %p52
        %p172 = pneg %p49
        %p173 = pneg %p73
        %p174 = pneg %p70
        %p175 = pneg %p94
        %p176 = pneg %p91
        %p177 = pneg %p122
        %p178 = pneg %p119
        %s179 = sand.u32 %s109, 1
        %s180 = scalar_lea.sflag [#allocation3], %s179
        %s181 = sand.u32 %s109, 1
        %s182 = smul.addr %s181, 8
        %s183 = scalar_lea.vmem [#allocation2], %s182
        %p184 = scmp.lt.s32.totalorder %s21, 1
        %s185 = scalar_select %p184, %s21, 1
        %p186 = scmp.lt.s32.totalorder %s22, 0
        %s187 = scalar_select %p186, %s22, 0
        %s188 = sadd.s32 %s187, %s185
        %s189 = smul.addr %s188, 4
        %s190 = scalar_lea.vmem %s0, %s189
        %v191 = vld [vmem:[%s1] sm:$0xff]
        %v192 = vld [vmem:[%s2] sm:$0xff]
        %v193 = vld [vmem:[%s190] sm:$0xf]
        %195 = vset.pattern.permute.xlu0 0
        %196 = vperm.xlu0 %195, %v192
        %v197 = vpop.permute.xlu0 %196
        %200 = vset.pattern.permute.xlu0 0
        %201 = vperm.xlu0 %200, %v191
        %v202 = vpop.permute.xlu0 %201
        %v204 = vlaneseq
        %v205 = vshrl.u32 %v204, 7
        %v206 = vsub.s32 0, %v205
        %v207 = vrot.slane %v193, %v206
        %v208 = vmul.f32 %v202, %v207
        %v209 = vadd.f32 %v197, %v208
        %210 = vset.pattern.permute.xlu0 1
        %211 = vperm.xlu0 %210, %v191
        %v212 = vpop.permute.xlu0 %211
        %v214 = vlaneseq
        %v215 = vshrl.u32 %v214, 7
        %v216 = vsub.s32 1, %v215
        %v217 = vrot.slane %v193, %v216
        %v218 = vmul.f32 %v212, %v217
        %v219 = vadd.f32 %v209, %v218
        %220 = vset.pattern.permute.xlu0 2
        %221 = vperm.xlu0 %220, %v191
        %v222 = vpop.permute.xlu0 %221
        %v224 = vlaneseq
        %v225 = vshrl.u32 %v224, 7
        %v226 = vsub.s32 2, %v225
        %v227 = vrot.slane %v193, %v226
        %v228 = vmul.f32 %v222, %v227
        %v229 = vadd.f32 %v219, %v228
        %230 = vset.pattern.permute.xlu0 3
        %231 = vperm.xlu0 %230, %v191
        %v232 = vpop.permute.xlu0 %231
        %v234 = vlaneseq
        %v235 = vshrl.u32 %v234, 7
        %v236 = vsub.s32 3, %v235
        %v237 = vrot.slane %v193, %v236
        %v238 = vmul.f32 %v232, %v237
        %v239 = vadd.f32 %v229, %v238
        %vm240 = vcmask 130048
        %241 = vst.msk [vmem:[%s183] sm:$0xff] %vm240, %v239
        %s242 = sand.u32 %s109, 1
        %s243 = scalar_lea.sflag [#allocation3], %s242
        %s244 = sand.u32 %s109, 1
        %s245 = smul.addr %s244, 8
        %s246 = scalar_lea.vmem [#allocation2], %s245
        // Predicated region
        $region33: #{tpu_custom_call.1} parent=31 // pred_check
          %p247 = pneg %p119
        $region34: #{tpu_custom_call.1} parent=31 // pred_check_branch
          %249 = sbr.rel (%p247) target = $region36
        $region35: #{tpu_custom_call.1} parent=31 // pred_region
          %s251 = ssub.s32 128, 128
          %252 = vsyncadd %s243, %s251
          %s253 = sadd.s32 %s22, %s21
          %s254 = smul.addr %s253, 128
          %s255 = scalar_lea.hbm %s3, %s254
          %s257 = sshll.u32 %s246, 4
          %s258 = int_to_ptr.vmem [resolvable:$true] %s257
          %260 = dma.vmem_to_hbm [thread:$0]  %s258, 128, %s255, %s243
        $region36: #{tpu_custom_call.1} parent=31 // pred_fallthru
          _
      $region32: #{tpu_custom_call.1} parent=5 // pred_fallthru
        _
      %p261 = scmp.le.s32.totalorder 2, %s12
      // Predicated region
      $region37: #{tpu_custom_call.1} parent=5 // pred_check
        %p262 = pneg %p261
      $region38: #{tpu_custom_call.1} parent=5 // pred_check_branch
        %264 = sbr.rel (%p262) target = $region40
      $region39: #{tpu_custom_call.1} parent=5 // pred_region
        %s265 = ssub.s32 %s12, 2
        // Predicated region
        $region41: #{tpu_custom_call.1} parent=39 // pred_check
          %p266 = pneg %p125
        $region42: #{tpu_custom_call.1} parent=39 // pred_check_branch
          %268 = sbr.rel (%p266) target = $region44
        $region43: #{tpu_custom_call.1} parent=39 // pred_region
          %s269 = sand.u32 %s110, 1
          %s270 = scalar_lea.sflag [#allocation3], %s269
          %s271 = sand.u32 %s110, 1
          %s272 = smul.addr %s271, 8
          %s273 = scalar_lea.vmem [#allocation2], %s272
          %274 = dma.done %s270, 128
        $region44: #{tpu_custom_call.1} parent=39 // pred_fallthru
          _
      $region40: #{tpu_custom_call.1} parent=5 // pred_fallthru
        _
    $region6: #{tpu_custom_call.1} parent=1 // loop_footer
      %s16 = sadd.s32 1, %s12
    $region7: #{tpu_custom_call.1} parent=1 // loop_footer_branch
      %11 = sbr.rel target = $region3
    $region8: #{tpu_custom_call.1} parent=1 // loop_exit
      _
    %275 = vsyncpa [#allocation3], 1
    %s276 = scalar_lea.sflag [#allocation3], 1
    %277 = vsyncpa %s276, 1

</llo_original>
